<compile_context>
chip_gen: v7x
topology: tpu7x:2x2x1
jax: 0.10.0
libtpu: 0.0.40
codegen_flags: <defaults>
</compile_context>

<pallas_src>
import jax
import jax.numpy as jnp
from jax.experimental import pallas as pl
from jax.experimental.pallas import tpu as pltpu

_LANES = 128
_SUBLANES = 8


def _linear_kernel(x_ref, w_ref, b_ref, o_ref):
    """One batch tile: o = x_tile @ W_packed + b.

    x_ref: (TB, Fp)   VMEM, tiled along (packed) batch rows, pipelined.
    w_ref: (Fp, pack) VMEM, constant index map -> resident across grid steps.
    b_ref: (1, 1)     SMEM scalar.
    o_ref: (TB, pack) VMEM.
    """
    y = jnp.dot(x_ref[...], w_ref[...], preferred_element_type=jnp.float32)
    o_ref[...] = (y + b_ref[0, 0]).astype(o_ref.dtype)


def _scoped_vmem_budget_bytes():
    """Generation-aware scoped-VMEM budget (v5e/v6e: 128 MiB phys, v7x: 64 MiB)."""
    cap = None
    try:
        cap = getattr(pltpu.get_tpu_info(), "vmem_capacity_bytes", None)
    except Exception:
        cap = None
    if cap is None:
        return 48 << 20                          # safe on every generation
    if cap >= (96 << 20):                        # v5e / v6e: 128 MiB physical VMEM
        return 64 << 20
    return max(32 << 20, min(48 << 20, (int(cap) * 3) // 4))   # v7x headroom


def linear_forward(x, weight, bias, *, batch_tile=None):
    """y = x @ weight.T + bias  (nn.Linear(n_features, 1) forward).

    x: (B, F) f32, weight: (1, F) f32, bias: (1,) f32  ->  (B, 1) f32.
    """
    B, F = x.shape
    itemsize = jnp.dtype(x.dtype).itemsize

    # ---- lane packing: `pack` consecutive rows share one 128-lane packed row ----
    pack = 1
    if F < _LANES and _LANES % F == 0 and B % (_LANES // F) == 0:
        pack = _LANES // F
    Fp = F * pack                        # packed feature width (128 when packing)
    Bp = B // pack                       # packed batch rows

    x_p = x.reshape(Bp, Fp)              # contiguous rows -> free reshape in HBM
    w_row = weight.reshape(1, F)
    if pack > 1:
        # Block-diagonal weight: segment j of a packed row dots with `weight`
        # and lands in output column j.
        eye = jnp.eye(pack, dtype=x.dtype)                         # (pack, pack)
        w_p = (eye[:, None, :] * w_row.reshape(1, F, 1)).reshape(Fp, pack)
    else:
        w_p = w_row.reshape(F, 1)                                  # (F, 1)
    b_2d = bias.reshape(1, 1).astype(x.dtype)

    # ---- batch-tile selection (packed rows), lane-padded byte accounting -------
    x_row_bytes = pl.cdiv(Fp, _LANES) * _LANES * itemsize          # pads to 128 lanes
    o_row_bytes = _LANES * itemsize                                # (TB,pack) pads too
    w_bytes = 2 * pl.cdiv(Fp, _SUBLANES) * _SUBLANES * _LANES * itemsize
    scoped = _scoped_vmem_budget_bytes()
    headroom = 4 << 20
    n_x_buf, n_o_buf = 3, 2                                        # Buffered(3) x, dbl out

    usable = max(scoped - headroom - w_bytes, 1 << 20)
    tb_budget = usable // (n_x_buf * x_row_bytes + n_o_buf * o_row_bytes)
    tb_budget = max(_SUBLANES, (tb_budget // _SUBLANES) * _SUBLANES)

    if batch_tile is None:
        tb = tb_budget
    else:
        tb = max(1, int(batch_tile) // pack)
        tb = max(_SUBLANES, (tb // _SUBLANES) * _SUBLANES)         # (8,128) sublane rule
        tb = min(tb, tb_budget)

    # v7x has two TensorCores with independent DMA paths: for big problems keep at
    # least two grid steps so the "parallel" axis can shard across them.
    if Bp * x_row_bytes >= (4 << 20):
        half = pl.cdiv(pl.cdiv(Bp, 2), _SUBLANES) * _SUBLANES
        tb = min(tb, max(half, _SUBLANES))

    if tb >= Bp:
        tb = Bp                                                    # single full block
    num_tiles = pl.cdiv(Bp, tb)

    # Triple-buffer the DMA-bound x stream only when the pipeline is long enough.
    x_spec_kwargs = {"pipeline_mode": pl.Buffered(3)} if num_tiles >= 3 else {}

    out = pl.pallas_call(
        _linear_kernel,
        out_shape=jax.ShapeDtypeStruct((Bp, pack), x.dtype),
        grid_spec=pltpu.PrefetchScalarGridSpec(
            num_scalar_prefetch=0,
            grid=(num_tiles,),
            in_specs=[
                # x: tiled along packed batch rows -> pipelined HBM reads.
                pl.BlockSpec((tb, Fp), lambda i: (i, 0), **x_spec_kwargs),
                # packed weight: constant index map -> VMEM-resident across steps.
                pl.BlockSpec((Fp, pack), lambda i: (0, 0)),
                # bias scalar lives in SMEM.
                pl.BlockSpec(memory_space=pltpu.MemorySpace.SMEM),
            ],
            out_specs=pl.BlockSpec((tb, pack), lambda i: (i, 0)),
        ),
        compiler_params=pltpu.CompilerParams(
            dimension_semantics=("parallel",),      # batch tiles are independent
            vmem_limit_bytes=int(scoped),
        ),
    )(x_p, w_p, b_2d)

    return out.reshape(B, 1)


if __name__ == "__main__":
    root = jax.random.PRNGKey(0)

    def make_case(seed_key, batch, n_features):
        k_x, k_w, k_b = jax.random.split(seed_key, 3)
        bound = 1.0 / (n_features ** 0.5)
        weight = jax.random.uniform(k_w, (1, n_features), jnp.float32, -bound, bound)
        bias = jax.random.uniform(k_b, (1,), jnp.float32, -bound, bound)
        x = jax.random.normal(k_x, (batch, n_features), jnp.float32)
        # Quantize test data to bf16-exact values so the correctness check is
        # independent of how the MXU emulates f32 matmuls (kernel stays pure f32).
        x = x.astype(jnp.bfloat16).astype(jnp.float32)
        weight = weight.astype(jnp.bfloat16).astype(jnp.float32)
        return x, weight, bias

    # Covers: lane-packed single tile, lane-packed multi-tile (Buffered(3) path),
    # and the F >= 128 unpacked path with a non-multiple-of-8 user tile (rounded)
    # plus a partial last block.
    cases = [
        (128, 32, None),
        (1024, 32, 256),
        (96, 256, 44),
    ]
    for idx, (batch, n_features, bt) in enumerate(cases):
        x, weight, bias = make_case(jax.random.fold_in(root, idx), batch, n_features)
        y = linear_forward(x, weight, bias, batch_tile=bt)
        jax.block_until_ready(y)
        y_ref = x @ weight.T + bias
        assert y.shape == (batch, 1)
        err = float(jnp.max(jnp.abs(y - y_ref)))
        assert jnp.allclose(y, y_ref, atol=2e-5, rtol=1e-5), (
            f"mismatch in case {idx}: max abs err {err}")
    print("KERNEL_OK")
</pallas_src>

<mosaic_0001>
module attributes {stable_mosaic.version = 11 : i64} {
  func.func @_linear_kernel(%arg0: i32, %arg1: memref<32x128xf32, #tpu.memory_space<vmem>>, %arg2: memref<128x4xf32, #tpu.memory_space<vmem>>, %arg3: memref<1x1xf32, #tpu.memory_space<smem>>, %arg4: memref<32x4xf32, #tpu.memory_space<vmem>>) attributes {dimension_semantics = [#tpu.dimension_semantics<parallel>], iteration_bounds = array<i64: 1>, scalar_prefetch = 0 : i64, scratch_operands = 0 : i64, tpu.core_type = #tpu.core_type<tc>, window_params = [{transform_indices = @transform_0, window_bounds = array<i64: 32, 128>}, {pipeline_mode = #tpu.pipeline_mode<synchronous>, transform_indices = @transform_1, window_bounds = array<i64: 128, 4>}, {transform_indices = @transform_2, window_bounds = array<i64: 1, 1>}, {transform_indices = @transform_3, window_bounds = array<i64: 32, 4>}]} {
    %c0 = arith.constant 0 : index
    %c0_0 = arith.constant 0 : index
    %0 = vector.load %arg1[%c0, %c0_0] : memref<32x128xf32, #tpu.memory_space<vmem>>, vector<32x128xf32>
    %c0_1 = arith.constant 0 : index
    %c0_2 = arith.constant 0 : index
    %1 = vector.load %arg2[%c0_1, %c0_2] : memref<128x4xf32, #tpu.memory_space<vmem>>, vector<128x4xf32>
    %cst = arith.constant dense<0.000000e+00> : vector<32x4xf32>
    %2 = tpu.matmul %0, %1, %cst {dimension_numbers = #tpu.dot_dimension_numbers<[1], [0], [0], [1], [0, 0, 1, 1], [], []>} : vector<32x128xf32>, vector<128x4xf32>, vector<32x4xf32> -> vector<32x4xf32>
    %c0_3 = arith.constant 0 : index
    %c0_4 = arith.constant 0 : index
    %3 = memref.load %arg3[%c0_3, %c0_4] : memref<1x1xf32, #tpu.memory_space<smem>>
    %4 = vector.broadcast %3 : f32 to vector<32x4xf32>
    %5 = arith.addf %2, %4 : vector<32x4xf32>
    %c0_5 = arith.constant 0 : index
    %c0_6 = arith.constant 0 : index
    %6 = vector.load %arg4[%c0_5, %c0_6] : memref<32x4xf32, #tpu.memory_space<vmem>>, vector<32x4xf32>
    tpu.vector_store %arg4[%c0_5, %c0_6], %5 {strides = array<i32>} : memref<32x4xf32, #tpu.memory_space<vmem>>, vector<32x4xf32>,
    return
  }
  func.func @transform_0(%arg0: i32) -> (i32, i32) {
    %c0_i32 = arith.constant 0 : i32
    %c0_i32_0 = arith.constant 0 : i32
    return %arg0, %c0_i32 : i32, i32
  }
  func.func @transform_1(%arg0: i32) -> (i32, i32) {
    %c0_i32 = arith.constant 0 : i32
    %c0_i32_0 = arith.constant 0 : i32
    %c0_i32_1 = arith.constant 0 : i32
    return %c0_i32, %c0_i32_0 : i32, i32
  }
  func.func @transform_2(%arg0: i32) -> (i32, i32) {
    %c0_i32 = arith.constant 0 : i32
    %c0_i32_0 = arith.constant 0 : i32
    %c0_i32_1 = arith.constant 0 : i32
    return %c0_i32, %c0_i32_0 : i32, i32
  }
  func.func @transform_3(%arg0: i32) -> (i32, i32) {
    %c0_i32 = arith.constant 0 : i32
    %c0_i32_0 = arith.constant 0 : i32
    return %arg0, %c0_i32 : i32, i32
  }
}

</mosaic_0001>

<llo_original>
// kernel: tpu_custom_call.1
$region0: #{tpu_custom_call.1}
  #allocation0 [shape = 'u32[]', space=smem, size = 0x4, offset = 0x4, fixed_abs, tag = 'smem constant byte address 0x4 - core index']
  #allocation1 [shape = 'u32[144,128]{1,0:T(1,128)}', space=vmem, size = 0x12000, scoped, tag = 'internal scratch']
  #allocation2 [shape = 'f32[1,1]{1,0:T(1,128)S(6)}', space=smem, size = 0x200, scoped, tag = 'scoped memory for tpu_custom_call.1']
  %s0 = inlined_call_operand.vmem [shape: f32[32,128], index: 0, kind: input, shape index: {}]
  %s1 = inlined_call_operand.vmem [shape: f32[128,4], index: 1, kind: input, shape index: {}]
  %s2 = inlined_call_operand.<no memory space> [shape: f32[1,1], index: 2, kind: input, shape index: {}]
  %s3 = inlined_call_operand.vmem [shape: f32[32,4], index: 3, kind: output, shape index: {}]
  %s4 = sld [smem:[#allocation0]]
  $region22: #{tpu_custom_call.1} parent=0
    _
  %s6 = ssub.s32 1, %s4
  %s7 = scalar_select 0, %s6, %s4
  %8 = sst [smem:[#allocation2]] %s2
  // Predicated region
  $region2: #{tpu_custom_call.1} parent=0 // pred_check
    _
  $region3: #{tpu_custom_call.1} parent=0 // pred_check_branch
    %10 = sbr.rel (0) target = $region5
  $region4: #{tpu_custom_call.1} parent=0 // pred_region
    _
  $region5: #{tpu_custom_call.1} parent=0 // pred_fallthru
    _
  // Predicated region
  $region6: #{tpu_custom_call.1} parent=0 // pred_check
    _
  $region7: #{tpu_custom_call.1} parent=0 // pred_check_branch
    %12 = sbr.rel (0) target = $region9
  $region8: #{tpu_custom_call.1} parent=0 // pred_region
    _
  $region9: #{tpu_custom_call.1} parent=0 // pred_fallthru
    _
  // Predicated region
  $region10: #{tpu_custom_call.1} parent=0 // pred_check
    _
  $region11: #{tpu_custom_call.1} parent=0 // pred_check_branch
    %14 = sbr.rel (0) target = $region13
  $region12: #{tpu_custom_call.1} parent=0 // pred_region
    _
  $region13: #{tpu_custom_call.1} parent=0 // pred_fallthru
    _
  %v15 = vld [vmem:[%s0] sm:$0xff]
  %v16 = vld [vmem:[%s0 + $0x8] sm:$0xff]
  %v17 = vld [vmem:[%s0 + $0x10] sm:$0xff]
  %v18 = vld [vmem:[%s0 + $0x18] sm:$0xff]
  %v19 = vld [vmem:[%s1] sm:$0xff]
  %v20 = vld [vmem:[%s1 + $0x8] sm:$0xff]
  %v21 = vld [vmem:[%s1 + $0x10] sm:$0xff]
  %v22 = vld [vmem:[%s1 + $0x18] sm:$0xff]
  %v23 = vld [vmem:[%s1 + $0x20] sm:$0xff]
  %v24 = vld [vmem:[%s1 + $0x28] sm:$0xff]
  %v25 = vld [vmem:[%s1 + $0x30] sm:$0xff]
  %v26 = vld [vmem:[%s1 + $0x38] sm:$0xff]
  %v27 = vld [vmem:[%s1 + $0x40] sm:$0xff]
  %v28 = vld [vmem:[%s1 + $0x48] sm:$0xff]
  %v29 = vld [vmem:[%s1 + $0x50] sm:$0xff]
  %v30 = vld [vmem:[%s1 + $0x58] sm:$0xff]
  %v31 = vld [vmem:[%s1 + $0x60] sm:$0xff]
  %v32 = vld [vmem:[%s1 + $0x68] sm:$0xff]
  %v33 = vld [vmem:[%s1 + $0x70] sm:$0xff]
  %v34 = vld [vmem:[%s1 + $0x78] sm:$0xff]
  %s35 = sld [smem:[#allocation2]]
  %v36 = vstv %s35
  %37 = vmatprep.subr.mxu0 0.0
  %38 = vmatpush1.msra.mxu0 %v19
  %39 = vmatprep.subr.mxu0 0.0
  %40 = vmatpush1.msra.mxu0 %v20
  %41 = vmatprep.subr.mxu0 0.0
  %42 = vmatpush1.msra.mxu0 %v21
  %43 = vmatprep.subr.mxu0 0.0
  %44 = vmatpush1.msra.mxu0 %v22
  %45 = vmatprep.subr.mxu0 0.0
  %46 = vmatpush1.msra.mxu0 %v23
  %47 = vmatprep.subr.mxu0 0.0
  %48 = vmatpush1.msra.mxu0 %v24
  %49 = vmatprep.subr.mxu0 0.0
  %50 = vmatpush1.msra.mxu0 %v25
  %51 = vmatprep.subr.mxu0 0.0
  %52 = vmatpush1.msra.mxu0 %v26
  %53 = vmatprep.subr.mxu0 0.0
  %54 = vmatpush1.msra.mxu0 %v27
  %55 = vmatprep.subr.mxu0 0.0
  %56 = vmatpush1.msra.mxu0 %v28
  %57 = vmatprep.subr.mxu0 0.0
  %58 = vmatpush1.msra.mxu0 %v29
  %59 = vmatprep.subr.mxu0 0.0
  %60 = vmatpush1.msra.mxu0 %v30
  %61 = vmatprep.subr.mxu0 0.0
  %62 = vmatpush1.msra.mxu0 %v31
  %63 = vmatprep.subr.mxu0 0.0
  %64 = vmatpush1.msra.mxu0 %v32
  %65 = vmatprep.subr.mxu0 0.0
  %66 = vmatpush1.msra.mxu0 %v33
  %67 = vmatprep.subr.mxu0 0.0
  %68 = vmatpush1.msra.mxu0 %v34
  %69 = vmatprep.subr.mxu0 0.0
  %70 = vmatpush1.msra.mxu0 0.0
  %71 = vmatprep.subr.mxu0 0.0
  %72 = vmatpush1.msra.mxu0 0.0
  %73 = vmatprep.subr.mxu0 0.0
  %74 = vmatpush1.msra.mxu0 0.0
  %75 = vmatprep.subr.mxu0 0.0
  %76 = vmatpush1.msra.mxu0 0.0
  %77 = vmatprep.subr.mxu0 0.0
  %78 = vmatpush1.msra.mxu0 0.0
  %79 = vmatprep.subr.mxu0 0.0
  %80 = vmatpush1.msra.mxu0 0.0
  %81 = vmatprep.subr.mxu0 0.0
  %82 = vmatpush1.msra.mxu0 0.0
  %83 = vmatprep.subr.mxu0 0.0
  %84 = vmatpush1.msra.mxu0 0.0
  %85 = vmatprep.subr.mxu0 0.0
  %86 = vmatpush1.msra.mxu0 0.0
  %87 = vmatprep.subr.mxu0 0.0
  %88 = vmatpush1.msra.mxu0 0.0
  %89 = vmatprep.subr.mxu0 0.0
  %90 = vmatpush1.msra.mxu0 0.0
  %91 = vmatprep.subr.mxu0 0.0
  %92 = vmatpush1.msra.mxu0 0.0
  %93 = vmatprep.subr.mxu0 0.0
  %94 = vmatpush1.msra.mxu0 0.0
  %95 = vmatprep.subr.mxu0 0.0
  %96 = vmatpush1.msra.mxu0 0.0
  %97 = vmatprep.subr.mxu0 0.0
  %98 = vmatpush1.msra.mxu0 0.0
  %99 = vmatprep.subr.mxu0 0.0
  %100 = vmatpush1.msra.mxu0 0.0
  %101 = vmatprep.mubr.f32.mxu0 0.0
  %102 = vmatmul.mubr.f32.gmra.mrb[0].mxu0 %v15
  %v103 = vpop.f32.mrb[0].mxu0
  %v104 = vadd.f32 %v36, %v103
  %v105 = vpop.f32.mrb[0].mxu0
  %106 = vmatprep.mubr.f32.mxu0 0.0
  %107 = vmatmul.mubr.f32.gmra.mrb[0].mxu0 %v16
  %v108 = vpop.f32.mrb[0].mxu0
  %v109 = vadd.f32 %v36, %v108
  %v110 = vpop.f32.mrb[0].mxu0
  %111 = vmatprep.mubr.f32.mxu0 0.0
  %112 = vmatmul.mubr.f32.gmra.mrb[0].mxu0 %v17
  %v113 = vpop.f32.mrb[0].mxu0
  %v114 = vadd.f32 %v36, %v113
  %v115 = vpop.f32.mrb[0].mxu0
  %116 = vmatprep.mubr.f32.mxu0 0.0
  %117 = vmatmul.mubr.f32.gmra.mrb[0].mxu0 %v18
  %v118 = vpop.f32.mrb[0].mxu0
  %v119 = vadd.f32 %v36, %v118
  %v120 = vpop.f32.mrb[0].mxu0
  %121 = vdwg.mxu0
  %vm122 = vcmask 31744
  %123 = vst.msk [vmem:[%s3] sm:$0xff] %vm122, %v104
  %124 = vst.msk [vmem:[%s3 + $0x8] sm:$0xff] %vm122, %v109
  %125 = vst.msk [vmem:[%s3 + $0x10] sm:$0xff] %vm122, %v114
  %126 = vst.msk [vmem:[%s3 + $0x18] sm:$0xff] %vm122, %v119
  // Predicated region
  $region14: #{tpu_custom_call.1} parent=0 // pred_check
    _
  $region15: #{tpu_custom_call.1} parent=0 // pred_check_branch
    %128 = sbr.rel (0) target = $region17
  $region16: #{tpu_custom_call.1} parent=0 // pred_region
    _
  $region17: #{tpu_custom_call.1} parent=0 // pred_fallthru
    _
  // Predicated region
  $region18: #{tpu_custom_call.1} parent=0 // pred_check
    _
  $region19: #{tpu_custom_call.1} parent=0 // pred_check_branch
    %130 = sbr.rel (0) target = $region21
  $region20: #{tpu_custom_call.1} parent=0 // pred_region
    _
  $region21: #{tpu_custom_call.1} parent=0 // pred_fallthru
    _

</llo_original>
